<compile_context>
chip_gen: v6e
topology: v6e:2x2x1
jax: 0.10.0
libtpu: 0.0.40
codegen_flags: <defaults>
</compile_context>

<pallas_src>
import jax
import jax.numpy as jnp
from jax.experimental import pallas as pl
from jax.experimental.pallas import tpu as pltpu


def bahdanau_kernel(enc_ref, dec_ref, cov_ref, we_ref, wcf_ref,
                    ctx_ref, alpha_ref, cov_out_ref):
    bb, P, E = enc_ref.shape
    A = we_ref.shape[1]

    enc = enc_ref[...]                               # (bb, P, E)
    cov = cov_ref[...]                               # (bb, P)  pixels on lanes
    wcf = wcf_ref[...]                               # (2, A)
    wc = wcf[0:1, :]                                 # (1, A) coverage_att weight row
    wf = wcf[1:2, :]                                 # (1, A) full_att weight row

    # encoder_att: one big MXU matmul over all bb*P pixel rows.
    enc_att = jnp.dot(enc.reshape(bb * P, E), we_ref[...],
                      preferred_element_type=jnp.float32).reshape(bb, P, A)

    # decoder_att (+ be + bd + bc), precomputed in the wrapper.
    dec_att = dec_ref[...]                           # (bb, 1, A)

    # coverage_att = Linear(1 -> A): broadcast multiply by the weight row.
    cov_att = cov[:, :, None] * wc                   # (bb, P, A)

    att = jnp.tanh(enc_att + dec_att + cov_att)      # (bb, P, A)

    # full_att = Linear(A -> 1); bias dropped (softmax is shift-invariant).
    score = jnp.sum(att * wf, axis=-1)               # (bb, P)  pixels on lanes

    # softmax over pixels (lane axis); reciprocal goes to the EUP.
    m = jnp.max(score, axis=-1, keepdims=True)
    e = jnp.exp(score - m)
    denom = jnp.sum(e, axis=-1, keepdims=True)
    alpha = e * pl.reciprocal(denom, approx=True)    # (bb, P)

    # context = sum_p alpha_p * enc_p — batched MXU contraction over pixels.
    ctx = jnp.einsum("bqp,bpe->bqe", alpha[:, None, :], enc,
                     preferred_element_type=jnp.float32)   # (bb, 1, E)

    ctx_ref[...] = ctx.reshape(bb, E).astype(ctx_ref.dtype)
    alpha_ref[...] = alpha.astype(alpha_ref.dtype)
    cov_out_ref[...] = (cov + alpha).astype(cov_out_ref.dtype)


def bahdanau_attention(encoder_out, decoder_hidden, coverage, params,
                       *, batch_block=None):
    B, P, E = encoder_out.shape
    A = params["We"].shape[1]

    if coverage is None:
        cov2d = jnp.zeros((B, P), dtype=jnp.float32)
    else:
        cov2d = jnp.squeeze(coverage, axis=2).astype(jnp.float32)   # (B, P)

    # Decoder projection hoisted out of the kernel (one fused GEMM for all B),
    # with all pre-tanh biases folded in.  bf is dropped: a constant shift
    # before the softmax cannot change alpha / context.
    bias_sum = params["be"] + params["bd"] + params["bc"]           # (1, A)
    dec_att = decoder_hidden @ params["Wd"] + bias_sum              # (B, A)
    dec_att = dec_att[:, None, :].astype(jnp.float32)               # (B, 1, A)

    # Pack the two tiny (1, A) weight rows into one block.
    wcf = jnp.concatenate([params["Wc"], params["Wf"]], axis=0)     # (2, A)

    # ---- choose the batch block -------------------------------------------
    if batch_block is None:
        # Fill the MXU (target bb*P >= 256 rows) but keep the double-buffered
        # encoder tile well inside scoped VMEM (v7x has only 64 MiB physical).
        vmem_budget = 16 << 20
        cap = max(1, vmem_budget // (2 * P * E * 4))
        bb = max(1, min(B, pl.cdiv(256, P), cap))
    else:
        bb = max(1, min(B, batch_block))
    # Sublane constraint for the 2-D lane-dense blocks: the second-to-last
    # block dim must be a multiple of 8 unless it spans the whole array.
    if bb < B and bb % 8 != 0:
        bb = min(B, ((bb + 7) // 8) * 8)

    Bp = pl.cdiv(B, bb) * bb
    enc = encoder_out.astype(jnp.float32)
    if Bp != B:
        pad = Bp - B
        enc = jnp.pad(enc, ((0, pad), (0, 0), (0, 0)))
        dec_att = jnp.pad(dec_att, ((0, pad), (0, 0), (0, 0)))
        cov2d = jnp.pad(cov2d, ((0, pad), (0, 0)))

    grid = (Bp // bb,)

    cost = pl.CostEstimate(
        flops=2 * Bp * P * E * A + 4 * Bp * P * A + 2 * Bp * P * E,
        transcendentals=Bp * P * (A + 1),
        bytes_accessed=4 * (Bp * P * E + Bp * A + Bp * P + E * A + 2 * A
                            + Bp * E + 2 * Bp * P),
    )

    ctx, alpha, cov_out = pl.pallas_call(
        bahdanau_kernel,
        out_shape=(
            jax.ShapeDtypeStruct((Bp, E), jnp.float32),   # context
            jax.ShapeDtypeStruct((Bp, P), jnp.float32),   # alpha (lane-dense)
            jax.ShapeDtypeStruct((Bp, P), jnp.float32),   # new coverage
        ),
        grid=grid,
        in_specs=[
            pl.BlockSpec((bb, P, E), lambda i: (i, 0, 0)),   # encoder_out
            pl.BlockSpec((bb, 1, A), lambda i: (i, 0, 0)),   # dec_att (+biases)
            pl.BlockSpec((bb, P), lambda i: (i, 0)),         # coverage (lane-dense)
            pl.BlockSpec((E, A), lambda i: (0, 0)),          # We
            pl.BlockSpec((2, A), lambda i: (0, 0)),          # [Wc; Wf]
        ],
        out_specs=(
            pl.BlockSpec((bb, E), lambda i: (i, 0)),
            pl.BlockSpec((bb, P), lambda i: (i, 0)),
            pl.BlockSpec((bb, P), lambda i: (i, 0)),
        ),
        compiler_params=pltpu.CompilerParams(
            dimension_semantics=("parallel",)),
        cost_estimate=cost,
    )(enc, dec_att, cov2d, params["We"], wcf)

    ctx = ctx[:B]
    alpha = alpha[:B]
    cov_out = cov_out[:B]
    return ctx, alpha, cov_out[..., None]    # (B,E), (B,P), (B,P,1)


def init_params(key, encoder_dim, decoder_dim, attention_dim):
    """Deterministic init mimicking nn.Linear's U(-1/sqrt(fan_in), 1/sqrt(fan_in))."""
    def linear(k, fan_in, fan_out):
        kw, kb = jax.random.split(k)
        bound = 1.0 / jnp.sqrt(fan_in)
        w = jax.random.uniform(kw, (fan_in, fan_out), jnp.float32, -bound, bound)
        b = jax.random.uniform(kb, (1, fan_out), jnp.float32, -bound, bound)
        return w, b

    k1, k2, k3, k4 = jax.random.split(key, 4)
    We, be = linear(k1, encoder_dim, attention_dim)
    Wd, bd = linear(k2, decoder_dim, attention_dim)
    Wc, bc = linear(k3, 1, attention_dim)
    Wf_, bf_ = linear(k4, attention_dim, 1)
    return {
        "We": We, "be": be,
        "Wd": Wd, "bd": bd,
        "Wc": Wc, "bc": bc,
        "Wf": Wf_.T,                 # stored as (1, A) so kernel does mul+reduce
        "bf": bf_.reshape(1, 1),     # kept for the reference; a no-op under softmax
    }


def reference(encoder_out, decoder_hidden, coverage, p):
    """Pure-JAX reference matching the PyTorch forward."""
    if coverage is None:
        coverage = jnp.zeros((encoder_out.shape[0], encoder_out.shape[1], 1),
                             dtype=encoder_out.dtype)
    enc_att = encoder_out @ p["We"] + p["be"][0]
    dec_att = (decoder_hidden @ p["Wd"] + p["bd"][0])[:, None, :]
    cov_att = coverage @ p["Wc"] + p["bc"][0]
    att = jnp.tanh(enc_att + dec_att + cov_att)
    score = jnp.squeeze(att @ p["Wf"].T + p["bf"][0], axis=2)
    alpha = jax.nn.softmax(score, axis=1)
    context = (encoder_out * alpha[..., None]).sum(axis=1)
    new_cov = coverage + alpha[..., None]
    return context, alpha, new_cov


if __name__ == "__main__":
    B, P, E, D, A = 2, 16, 32, 32, 32   # batch, num_pixels, encoder_dim, decoder_dim, attention_dim

    key = jax.random.PRNGKey(0)
    k_enc, k_dec, k_cov, k_par = jax.random.split(key, 4)

    encoder_out = jax.random.normal(k_enc, (B, P, E), jnp.float32)
    decoder_hidden = jax.random.normal(k_dec, (B, D), jnp.float32)
    coverage = jax.random.uniform(k_cov, (B, P, 1), jnp.float32)

    params = init_params(k_par, E, D, A)

    # With explicit coverage.
    ctx, alpha, new_cov = bahdanau_attention(encoder_out, decoder_hidden, coverage, params)
    jax.block_until_ready((ctx, alpha, new_cov))
    ctx_r, alpha_r, cov_r = reference(encoder_out, decoder_hidden, coverage, params)
    assert jnp.allclose(ctx, ctx_r, rtol=2e-3, atol=2e-3)
    assert jnp.allclose(alpha, alpha_r, rtol=2e-3, atol=2e-3)
    assert jnp.allclose(new_cov, cov_r, rtol=2e-3, atol=2e-3)

    # coverage=None path (module initializes coverage with zeros).
    ctx0, alpha0, cov0 = bahdanau_attention(encoder_out, decoder_hidden, None, params)
    jax.block_until_ready((ctx0, alpha0, cov0))
    ctx0_r, alpha0_r, cov0_r = reference(encoder_out, decoder_hidden, None, params)
    assert jnp.allclose(ctx0, ctx0_r, rtol=2e-3, atol=2e-3)
    assert jnp.allclose(alpha0, alpha0_r, rtol=2e-3, atol=2e-3)
    assert jnp.allclose(cov0, cov0_r, rtol=2e-3, atol=2e-3)

    print("KERNEL_OK")
</pallas_src>

<mosaic_0001>
module attributes {stable_mosaic.version = 11 : i64} {
  func.func @bahdanau_kernel(%arg0: i32, %arg1: memref<2x16x32xf32, #tpu.memory_space<vmem>>, %arg2: memref<2x1x32xf32, #tpu.memory_space<vmem>>, %arg3: memref<2x16xf32, #tpu.memory_space<vmem>>, %arg4: memref<32x32xf32, #tpu.memory_space<vmem>>, %arg5: memref<2x32xf32, #tpu.memory_space<vmem>>, %arg6: memref<2x32xf32, #tpu.memory_space<vmem>>, %arg7: memref<2x16xf32, #tpu.memory_space<vmem>>, %arg8: memref<2x16xf32, #tpu.memory_space<vmem>>) attributes {dimension_semantics = [#tpu.dimension_semantics<parallel>], iteration_bounds = array<i64: 1>, scalar_prefetch = 0 : i64, scratch_operands = 0 : i64, tpu.core_type = #tpu.core_type<tc>, window_params = [{transform_indices = @transform_0, window_bounds = array<i64: 2, 16, 32>}, {transform_indices = @transform_1, window_bounds = array<i64: 2, 1, 32>}, {transform_indices = @transform_2, window_bounds = array<i64: 2, 16>}, {pipeline_mode = #tpu.pipeline_mode<synchronous>, transform_indices = @transform_3, window_bounds = array<i64: 32, 32>}, {pipeline_mode = #tpu.pipeline_mode<synchronous>, transform_indices = @transform_4, window_bounds = array<i64: 2, 32>}, {transform_indices = @transform_5, window_bounds = array<i64: 2, 32>}, {transform_indices = @transform_6, window_bounds = array<i64: 2, 16>}, {transform_indices = @transform_7, window_bounds = array<i64: 2, 16>}]} {
    %c0 = arith.constant 0 : index
    %c0_0 = arith.constant 0 : index
    %c0_1 = arith.constant 0 : index
    %0 = vector.load %arg1[%c0, %c0_0, %c0_1] : memref<2x16x32xf32, #tpu.memory_space<vmem>>, vector<2x16x32xf32>
    %c0_2 = arith.constant 0 : index
    %c0_3 = arith.constant 0 : index
    %1 = vector.load %arg3[%c0_2, %c0_3] : memref<2x16xf32, #tpu.memory_space<vmem>>, vector<2x16xf32>
    %c0_4 = arith.constant 0 : index
    %c0_5 = arith.constant 0 : index
    %2 = vector.load %arg5[%c0_4, %c0_5] : memref<2x32xf32, #tpu.memory_space<vmem>>, vector<2x32xf32>
    %3 = vector.extract_strided_slice %2 {offsets = [0, 0], sizes = [1, 32], strides = [1, 1]} : vector<2x32xf32> to vector<1x32xf32>
    %4 = vector.extract_strided_slice %2 {offsets = [1, 0], sizes = [1, 32], strides = [1, 1]} : vector<2x32xf32> to vector<1x32xf32>
    %5 = vector.shape_cast %0 : vector<2x16x32xf32> to vector<32x32xf32>
    %c0_6 = arith.constant 0 : index
    %c0_7 = arith.constant 0 : index
    %6 = vector.load %arg4[%c0_6, %c0_7] : memref<32x32xf32, #tpu.memory_space<vmem>>, vector<32x32xf32>
    %cst = arith.constant dense<0.000000e+00> : vector<32x32xf32>
    %7 = tpu.matmul %5, %6, %cst {dimension_numbers = #tpu.dot_dimension_numbers<[1], [0], [0], [1], [0, 0, 1, 1], [], []>} : vector<32x32xf32>, vector<32x32xf32>, vector<32x32xf32> -> vector<32x32xf32>
    %8 = vector.shape_cast %7 : vector<32x32xf32> to vector<2x16x32xf32>
    %c0_8 = arith.constant 0 : index
    %c0_9 = arith.constant 0 : index
    %c0_10 = arith.constant 0 : index
    %9 = vector.load %arg2[%c0_8, %c0_9, %c0_10] : memref<2x1x32xf32, #tpu.memory_space<vmem>>, vector<2x1x32xf32>
    %10 = vector.shape_cast %1 : vector<2x16xf32> to vector<2x16x1xf32>
    %11 = vector.shape_cast %3 : vector<1x32xf32> to vector<1x1x32xf32>
    %12 = vector.broadcast %10 : vector<2x16x1xf32> to vector<2x16x32xf32>
    %13 = vector.broadcast %11 : vector<1x1x32xf32> to vector<2x16x32xf32>
    %14 = arith.mulf %12, %13 : vector<2x16x32xf32>
    %15 = vector.broadcast %9 : vector<2x1x32xf32> to vector<2x16x32xf32>
    %16 = arith.addf %8, %15 : vector<2x16x32xf32>
    %17 = arith.addf %16, %14 : vector<2x16x32xf32>
    %18 = math.tanh %17 : vector<2x16x32xf32>
    %19 = vector.shape_cast %4 : vector<1x32xf32> to vector<1x1x32xf32>
    %20 = vector.broadcast %19 : vector<1x1x32xf32> to vector<2x16x32xf32>
    %21 = arith.mulf %18, %20 : vector<2x16x32xf32>
    %cst_11 = arith.constant dense<0.000000e+00> : vector<2x16xf32>
    %22 = vector.multi_reduction <add>, %21, %cst_11 [2] : vector<2x16x32xf32> to vector<2x16xf32>
    %cst_12 = arith.constant dense<0xFF800000> : vector<2xf32>
    %23 = vector.multi_reduction <maximumf>, %22, %cst_12 [1] : vector<2x16xf32> to vector<2xf32>
    %24 = vector.shape_cast %23 : vector<2xf32> to vector<2x1xf32>
    %25 = vector.broadcast %24 : vector<2x1xf32> to vector<2x16xf32>
    %26 = arith.subf %22, %25 : vector<2x16xf32>
    %27 = math.exp %26 : vector<2x16xf32>
    %cst_13 = arith.constant dense<0.000000e+00> : vector<2xf32>
    %28 = vector.multi_reduction <add>, %27, %cst_13 [1] : vector<2x16xf32> to vector<2xf32>
    %29 = vector.shape_cast %28 : vector<2xf32> to vector<2x1xf32>
    %30 = tpu.reciprocal %29 {approx = true} : vector<2x1xf32> -> vector<2x1xf32>
    %31 = vector.broadcast %30 : vector<2x1xf32> to vector<2x16xf32>
    %32 = arith.mulf %27, %31 : vector<2x16xf32>
    %33 = vector.shape_cast %32 : vector<2x16xf32> to vector<2x1x16xf32>
    "tpu.trace_start"() <{level = 10 : i32, message = "bqp,bpe->bqe"}> : () -> ()
    %cst_14 = arith.constant dense<0.000000e+00> : vector<2x1x32xf32>
    %34 = tpu.matmul %33, %0, %cst_14 {dimension_numbers = #tpu.dot_dimension_numbers<[2], [1], [1], [2], [0, 0, 0, 1, 1, 2], [0], [0]>} : vector<2x1x16xf32>, vector<2x16x32xf32>, vector<2x1x32xf32> -> vector<2x1x32xf32>
    "tpu.trace_stop"() : () -> ()
    %35 = vector.shape_cast %34 : vector<2x1x32xf32> to vector<2x32xf32>
    %c0_15 = arith.constant 0 : index
    %c0_16 = arith.constant 0 : index
    %36 = vector.load %arg6[%c0_15, %c0_16] : memref<2x32xf32, #tpu.memory_space<vmem>>, vector<2x32xf32>
    tpu.vector_store %arg6[%c0_15, %c0_16], %35 {strides = array<i32>} : memref<2x32xf32, #tpu.memory_space<vmem>>, vector<2x32xf32>,
    %c0_17 = arith.constant 0 : index
    %c0_18 = arith.constant 0 : index
    %37 = vector.load %arg7[%c0_17, %c0_18] : memref<2x16xf32, #tpu.memory_space<vmem>>, vector<2x16xf32>
    tpu.vector_store %arg7[%c0_17, %c0_18], %32 {strides = array<i32>} : memref<2x16xf32, #tpu.memory_space<vmem>>, vector<2x16xf32>,
    %38 = arith.addf %1, %32 : vector<2x16xf32>
    %c0_19 = arith.constant 0 : index
    %c0_20 = arith.constant 0 : index
    %39 = vector.load %arg8[%c0_19, %c0_20] : memref<2x16xf32, #tpu.memory_space<vmem>>, vector<2x16xf32>
    tpu.vector_store %arg8[%c0_19, %c0_20], %38 {strides = array<i32>} : memref<2x16xf32, #tpu.memory_space<vmem>>, vector<2x16xf32>,
    return
  }
  func.func @transform_0(%arg0: i32) -> (i32, i32, i32) {
    %c0_i32 = arith.constant 0 : i32
    %c0_i32_0 = arith.constant 0 : i32
    %c0_i32_1 = arith.constant 0 : i32
    return %arg0, %c0_i32, %c0_i32_0 : i32, i32, i32
  }
  func.func @transform_1(%arg0: i32) -> (i32, i32, i32) {
    %c0_i32 = arith.constant 0 : i32
    %c0_i32_0 = arith.constant 0 : i32
    %c0_i32_1 = arith.constant 0 : i32
    return %arg0, %c0_i32, %c0_i32_0 : i32, i32, i32
  }
  func.func @transform_2(%arg0: i32) -> (i32, i32) {
    %c0_i32 = arith.constant 0 : i32
    %c0_i32_0 = arith.constant 0 : i32
    return %arg0, %c0_i32 : i32, i32
  }
  func.func @transform_3(%arg0: i32) -> (i32, i32) {
    %c0_i32 = arith.constant 0 : i32
    %c0_i32_0 = arith.constant 0 : i32
    %c0_i32_1 = arith.constant 0 : i32
    return %c0_i32, %c0_i32_0 : i32, i32
  }
  func.func @transform_4(%arg0: i32) -> (i32, i32) {
    %c0_i32 = arith.constant 0 : i32
    %c0_i32_0 = arith.constant 0 : i32
    %c0_i32_1 = arith.constant 0 : i32
    return %c0_i32, %c0_i32_0 : i32, i32
  }
  func.func @transform_5(%arg0: i32) -> (i32, i32) {
    %c0_i32 = arith.constant 0 : i32
    %c0_i32_0 = arith.constant 0 : i32
    return %arg0, %c0_i32 : i32, i32
  }
  func.func @transform_6(%arg0: i32) -> (i32, i32) {
    %c0_i32 = arith.constant 0 : i32
    %c0_i32_0 = arith.constant 0 : i32
    return %arg0, %c0_i32 : i32, i32
  }
  func.func @transform_7(%arg0: i32) -> (i32, i32) {
    %c0_i32 = arith.constant 0 : i32
    %c0_i32_0 = arith.constant 0 : i32
    return %arg0, %c0_i32 : i32, i32
  }
}

</mosaic_0001>

<llo_original>
// kernel: tpu_custom_call.1
$region0: #{tpu_custom_call.1}
  #allocation0 [shape = 'u32[]', space=smem, size = 0x4, offset = 0x4, fixed_abs, tag = 'smem constant byte address 0x4 - core index']
  #allocation1 [shape = 'u32[144,128]{1,0:T(1,128)}', space=vmem, size = 0x12000, scoped, tag = 'internal scratch']
  %s0 = inlined_call_operand.hbm [shape: f32[2,16,32], index: 0, kind: input, shape index: {}]
  %s1 = inlined_call_operand.hbm [shape: f32[2,1,32], index: 1, kind: input, shape index: {}]
  %s2 = inlined_call_operand.vmem [shape: f32[2,16], index: 2, kind: input, shape index: {}]
  %s3 = inlined_call_operand.hbm [shape: f32[32,32], index: 3, kind: input, shape index: {}]
  %s4 = inlined_call_operand.vmem [shape: f32[2,32], index: 4, kind: input, shape index: {}]
  %s5 = inlined_call_operand.hbm [shape: f32[2,32], index: 5, kind: output, shape index: {0}]
  %s6 = inlined_call_operand.hbm [shape: f32[2,16], index: 6, kind: output, shape index: {1}]
  %s7 = inlined_call_operand.hbm [shape: f32[2,16], index: 7, kind: output, shape index: {2}]
  %8 = xla_tuple %s5, %s6, %s7
  %s9 = sld [smem:[#allocation0]]
  $region58: #{tpu_custom_call.1} parent=0
    _
  %s11 = ssub.s32 1, %s9
  %s12 = scalar_select 0, %s11, %s9
  $region1: #{tpu_custom_call.1} parent=0
    #allocation2 [shape = 'u8[16384]{0}', space=vmem, size = 0x4000, scoped, tag = 'input window, operand 0, single buffered']
    #allocation3 [shape = 's32[1]{0}', space=sflag, size = 0x4, scoped, tag = 'scoped memory for tpu_custom_call.1']
    #allocation4 [shape = 's32[1]{0}', space=sflag, size = 0x4, scoped, tag = 'scoped memory for tpu_custom_call.1']
    #allocation5 [shape = 'u8[1024]{0}', space=vmem, size = 0x400, scoped, tag = 'input window, operand 1, single buffered']
    #allocation6 [shape = 's32[1]{0}', space=sflag, size = 0x4, scoped, tag = 'scoped memory for tpu_custom_call.1']
    #allocation7 [shape = 'u8[16384]{0}', space=vmem, size = 0x4000, scoped, tag = 'input window, operand 3, single buffered']
    #allocation8 [shape = 'u8[1024]{0}', space=vmem, size = 0x400, scoped, tag = 'output window, operand 0, single buffered']
    #allocation9 [shape = 'u8[1024]{0}', space=vmem, size = 0x400, scoped, tag = 'output window, operand 1, single buffered']
    #allocation10 [shape = 's32[1]{0}', space=sflag, size = 0x4, scoped, tag = 'scoped memory for tpu_custom_call.1']
    #allocation11 [shape = 'u8[1024]{0}', space=vmem, size = 0x400, scoped, tag = 'output window, operand 2, single buffered']
    %13 = vsyncpa [#allocation3], 0
    %14 = vsyncpa [#allocation6], 0
    %15 = vsyncpa [#allocation4], 0
    %16 = vsyncpa [#allocation10], 0
    // Predicated region
    $region2: #{tpu_custom_call.1} parent=1 // pred_check
      _
    $region3: #{tpu_custom_call.1} parent=1 // pred_check_branch
      %18 = sbr.rel (0) target = $region5
    $region4: #{tpu_custom_call.1} parent=1 // pred_region
      %s20 = ssub.s32 512, 512
      %21 = vsyncadd [#allocation3], %s20
      %s22 = sshll.u32 [#allocation2], 4
      %s23 = int_to_ptr.vmem [resolvable:$true] %s22
      %28 = dma.hbm_to_vmem [thread:$0]  %s0, 512, %s23, [#allocation3], 128, 128, 8
    $region5: #{tpu_custom_call.1} parent=1 // pred_fallthru
      _
    // Predicated region
    $region6: #{tpu_custom_call.1} parent=1 // pred_check
      _
    $region7: #{tpu_custom_call.1} parent=1 // pred_check_branch
      %30 = sbr.rel (0) target = $region9
    $region8: #{tpu_custom_call.1} parent=1 // pred_region
      %s32 = ssub.s32 32, 32
      %33 = vsyncadd [#allocation6], %s32
      %s34 = sshll.u32 [#allocation5], 4
      %s35 = int_to_ptr.vmem [resolvable:$true] %s34
      %40 = dma.hbm_to_vmem [thread:$0]  %s1, 32, %s35, [#allocation6], 16, 16, 1
    $region9: #{tpu_custom_call.1} parent=1 // pred_fallthru
      _
    // Predicated region
    $region10: #{tpu_custom_call.1} parent=1 // pred_check
      _
    $region11: #{tpu_custom_call.1} parent=1 // pred_check_branch
      %42 = sbr.rel (0) target = $region13
    $region12: #{tpu_custom_call.1} parent=1 // pred_region
      _
    $region13: #{tpu_custom_call.1} parent=1 // pred_fallthru
      _
    // Predicated region
    $region14: #{tpu_custom_call.1} parent=1 // pred_check
      _
    $region15: #{tpu_custom_call.1} parent=1 // pred_check_branch
      %44 = sbr.rel (0) target = $region17
    $region16: #{tpu_custom_call.1} parent=1 // pred_region
      %s46 = ssub.s32 512, 512
      %47 = vsyncadd [#allocation6], %s46
      %s48 = sshll.u32 [#allocation7], 4
      %s49 = int_to_ptr.vmem [resolvable:$true] %s48
      %54 = dma.hbm_to_vmem [thread:$0]  %s3, 512, %s49, [#allocation6], 128, 128, 8
    $region17: #{tpu_custom_call.1} parent=1 // pred_fallthru
      _
    // Predicated region
    $region18: #{tpu_custom_call.1} parent=1 // pred_check
      _
    $region19: #{tpu_custom_call.1} parent=1 // pred_check_branch
      %56 = sbr.rel (0) target = $region21
    $region20: #{tpu_custom_call.1} parent=1 // pred_region
      _
    $region21: #{tpu_custom_call.1} parent=1 // pred_fallthru
      _
    // Predicated region
    $region22: #{tpu_custom_call.1} parent=1 // pred_check
      _
    $region23: #{tpu_custom_call.1} parent=1 // pred_check_branch
      %58 = sbr.rel (0) target = $region25
    $region24: #{tpu_custom_call.1} parent=1 // pred_region
      %59 = dma.done [#allocation3], 512
    $region25: #{tpu_custom_call.1} parent=1 // pred_fallthru
      _
    // Predicated region
    $region26: #{tpu_custom_call.1} parent=1 // pred_check
      _
    $region27: #{tpu_custom_call.1} parent=1 // pred_check_branch
      %61 = sbr.rel (0) target = $region29
    $region28: #{tpu_custom_call.1} parent=1 // pred_region
      %62 = dma.done [#allocation6], 32
    $region29: #{tpu_custom_call.1} parent=1 // pred_fallthru
      _
    // Predicated region
    $region30: #{tpu_custom_call.1} parent=1 // pred_check
      _
    $region31: #{tpu_custom_call.1} parent=1 // pred_check_branch
      %64 = sbr.rel (0) target = $region33
    $region32: #{tpu_custom_call.1} parent=1 // pred_region
      %65 = dma.done [#allocation6], 512
    $region33: #{tpu_custom_call.1} parent=1 // pred_fallthru
      _
    %v66 = vld [vmem:[#allocation2] sm:$0xff]
    %v67 = vld [vmem:[#allocation2 + $0x8] sm:$0xff]
    %v68 = vld [vmem:[#allocation2 + $0x10] sm:$0xff]
    %v69 = vld [vmem:[#allocation2 + $0x18] sm:$0xff]
    %v70 = vld [vmem:[%s2] sm:$0x3]
    %v71 = vld [vmem:[%s4] sm:$0x3]
    %v72 = vld [vmem:[#allocation7] sm:$0xff]
    %v73 = vld [vmem:[#allocation7 + $0x8] sm:$0xff]
    %v74 = vld [vmem:[#allocation7 + $0x10] sm:$0xff]
    %v75 = vld [vmem:[#allocation7 + $0x18] sm:$0xff]
    %vm76 = vcmask 261120
    %v78 = vsel %vm76, %v66, 0
    %v81 = vsel %vm76, %v67, 0
    %v84 = vsel %vm76, %v68, 0
    %v87 = vsel %vm76, %v69, 0
    %89 = vmatprep.subr.mxu0 0.0
    %90 = vmatpush1.msra.mxu0 0.0
    %91 = vmatprep.subr.mxu0 0.0
    %92 = vmatpush1.msra.mxu0 0.0
    %93 = vmatprep.subr.mxu0 0.0
    %94 = vmatpush1.msra.mxu0 0.0
    %95 = vmatprep.subr.mxu0 0.0
    %96 = vmatpush1.msra.mxu0 0.0
    %97 = vmatprep.subr.mxu0 0.0
    %98 = vmatpush1.msra.mxu0 0.0
    %99 = vmatprep.subr.mxu0 0.0
    %100 = vmatpush1.msra.mxu0 0.0
    %101 = vmatprep.subr.mxu0 0.0
    %102 = vmatpush1.msra.mxu0 0.0
    %103 = vmatprep.subr.mxu0 0.0
    %104 = vmatpush1.msra.mxu0 0.0
    %105 = vmatprep.subr.mxu0 0.0
    %106 = vmatpush1.msra.mxu0 0.0
    %107 = vmatprep.subr.mxu0 0.0
    %108 = vmatpush1.msra.mxu0 0.0
    %109 = vmatprep.subr.mxu0 0.0
    %110 = vmatpush1.msra.mxu0 0.0
    %111 = vmatprep.subr.mxu0 0.0
    %112 = vmatpush1.msra.mxu0 0.0
    %113 = vmatprep.subr.mxu0 0.0
    %114 = vmatpush1.msra.mxu0 %v75
    %115 = vmatprep.subr.mxu0 0.0
    %116 = vmatpush1.msra.mxu0 %v74
    %117 = vmatprep.subr.mxu0 0.0
    %118 = vmatpush1.msra.mxu0 %v73
    %119 = vmatprep.subr.mxu0 0.0
    %120 = vmatpush1.msra.mxu0 %v72
    %121 = vmatprep.subr.mxu0 0.0
    %122 = vmatpush2.msra.mxu0 0.0
    %123 = vmatprep.subr.mxu0 0.0
    %124 = vmatpush2.msra.mxu0 0.0
    %125 = vmatprep.subr.mxu0 0.0
    %126 = vmatpush2.msra.mxu0 0.0
    %127 = vmatprep.subr.mxu0 0.0
    %128 = vmatpush2.msra.mxu0 0.0
    %129 = vmatprep.subr.mxu0 0.0
    %130 = vmatpush2.msra.mxu0 0.0
    %131 = vmatprep.subr.mxu0 0.0
    %132 = vmatpush2.msra.mxu0 0.0
    %133 = vmatprep.subr.mxu0 0.0
    %134 = vmatpush2.msra.mxu0 0.0
    %135 = vmatprep.subr.mxu0 0.0
    %136 = vmatpush2.msra.mxu0 0.0
    %137 = vmatprep.subr.mxu0 0.0
    %138 = vmatpush2.msra.mxu0 0.0
    %139 = vmatprep.subr.mxu0 0.0
    %140 = vmatpush2.msra.mxu0 0.0
    %141 = vmatprep.subr.mxu0 0.0
    %142 = vmatpush2.msra.mxu0 0.0
    %143 = vmatprep.subr.mxu0 0.0
    %144 = vmatpush2.msra.mxu0 0.0
    %145 = vmatprep.subr.mxu0 0.0
    %146 = vmatpush2.msra.mxu0 0.0
    %147 = vmatprep.subr.mxu0 0.0
    %148 = vmatpush2.msra.mxu0 0.0
    %149 = vmatprep.subr.mxu0 0.0
    %150 = vmatpush2.msra.mxu0 0.0
    %151 = vmatprep.subr.mxu0 0.0
    %152 = vmatpush2.msra.mxu0 0.0
    %153 = vmatprep.mubr.f32.mxu0 0.0
    %154 = vmatmul.mubr.f32.gmra.mxu0 %v78
    %v155 = vpop.f32.mrf.mxu0
    %v156 = vadd.f32 0.0, %v155
    %v157 = vpop.f32.mrf.mxu0
    %158 = vmatprep.mubr.f32.mxu0 0.0
    %159 = vmatmul.mubr.f32.gmra.mxu0 %v81
    %v160 = vpop.f32.mrf.mxu0
    %v161 = vadd.f32 0.0, %v160
    %v162 = vpop.f32.mrf.mxu0
    %163 = vmatprep.mubr.f32.mxu0 0.0
    %164 = vmatmul.mubr.f32.gmra.mxu0 %v84
    %v165 = vpop.f32.mrf.mxu0
    %v166 = vadd.f32 0.0, %v165
    %v167 = vpop.f32.mrf.mxu0
    %168 = vmatprep.mubr.f32.mxu0 0.0
    %169 = vmatmul.mubr.f32.gmra.mxu0 %v87
    %v170 = vpop.f32.mrf.mxu0
    %v171 = vadd.f32 0.0, %v170
    %v172 = vpop.f32.mrf.mxu0
    %173 = vdwg.mxu0
    %v174 = vld [vmem:[#allocation5] sm:$0x1]
    %v175 = vld [vmem:[#allocation5 + $0x1] sm:$0x1]
    %v176 = vlaneseq
    %v177 = vshrl.u32 %v176, 7
    %v178 = vsub.s32 0, %v177
    %v179 = vrot.slane %v70, %v178
    %181 = vbcast.lane.b32.xlu0 %v179, 256
    %v182 = vpop.permute.xlu0 %181
    %s184 = sor.u32 256, 8
    %185 = vbcast.lane.b32.xlu0 %v179, %s184
    %v186 = vpop.permute.xlu0 %185
    %v187 = vlaneseq
    %v188 = vshrl.u32 %v187, 7
    %v189 = vsub.s32 1, %v188
    %v190 = vrot.slane %v70, %v189
    %192 = vbcast.lane.b32.xlu0 %v190, 256
    %v193 = vpop.permute.xlu0 %192
    %s195 = sor.u32 256, 8
    %196 = vbcast.lane.b32.xlu0 %v190, %s195
    %v197 = vpop.permute.xlu0 %196
    %v198 = vlaneseq
    %v199 = vshrl.u32 %v198, 7
    %v200 = vsub.s32 0, %v199
    %v201 = vrot.slane %v71, %v200
    %v202 = vmul.f32 %v182, %v201
    %v203 = vmul.f32 %v186, %v201
    %v204 = vmul.f32 %v193, %v201
    %v205 = vmul.f32 %v197, %v201
    %v208 = vlaneseq
    %v209 = vshrl.u32 %v208, 7
    %v210 = vsub.s32 0, %v209
    %v211 = vrot.slane %v174, %v210
    %v212 = vlaneseq
    %v213 = vshrl.u32 %v212, 7
    %v214 = vsub.s32 0, %v213
    %v215 = vrot.slane %v175, %v214
    %v218 = vadd.f32 %v156, %v211
    %v219 = vadd.f32 %v161, %v211
    %v220 = vadd.f32 %v166, %v215
    %v221 = vadd.f32 %v171, %v215
    %v222 = vadd.f32 %v218, %v202
    %v223 = vadd.f32 %v219, %v203
    %v224 = vadd.f32 %v220, %v204
    %v225 = vadd.f32 %v221, %v205
    %v226 = vtanh.pop %v222
    %v227 = vtanh.pop %v223
    %v228 = vtanh.pop %v224
    %v229 = vtanh.pop %v225
    %v230 = vlaneseq
    %v231 = vshrl.u32 %v230, 7
    %v232 = vsub.s32 1, %v231
    %v233 = vrot.slane %v71, %v232
    %v234 = vmul.f32 %v226, %v233
    %v235 = vmul.f32 %v227, %v233
    %v236 = vmul.f32 %v228, %v233
    %v237 = vmul.f32 %v229, %v233
    %v238 = vsel %vm76, %v234, 0.0
    %239 = vadd.xlane.f32.xlu0 %v238
    %v240 = vpop.xlane.xlu0 %239
    %v241 = vsel %vm76, %v235, 0.0
    %242 = vadd.xlane.f32.xlu0 %v241
    %v243 = vpop.xlane.xlu0 %242
    %v244 = vsel %vm76, %v236, 0.0
    %245 = vadd.xlane.f32.xlu0 %v244
    %v246 = vpop.xlane.xlu0 %245
    %v247 = vsel %vm76, %v237, 0.0
    %248 = vadd.xlane.f32.xlu0 %v247
    %v249 = vpop.xlane.xlu0 %248
    %v254 = vlaneseq
    %v255 = vand.u32 %v254, 127
    %v256 = vlaneseq
    %v257 = vshrl.u32 %v256, 7
    %v258 = vsub.s32 %v255, %v257
    %v259 = vrot.slane %v240, %v258
    %v260 = vadd.s32 %v255, 4294967288
    %v261 = vlaneseq
    %v262 = vshrl.u32 %v261, 7
    %v263 = vsub.s32 %v260, %v262
    %v264 = vrot.slane %v243, %v263
    %vm265 = vcmask 130112
    %v266 = vsel %vm265, %v264, %v259
    %v267 = vlaneseq
    %v268 = vshrl.u32 %v267, 7
    %v269 = vsub.s32 %v255, %v268
    %v270 = vrot.slane %v246, %v269
    %v271 = vlaneseq
    %v272 = vshrl.u32 %v271, 7
    %v273 = vsub.s32 %v260, %v272
    %v274 = vrot.slane %v249, %v273
    %v275 = vsel %vm265, %v274, %v270
    %vm276 = vcmask 1041409
    %v277 = vsel %vm276, %v275, %v266
    %vm279 = vcmask 123904
    %v280 = vsel %vm279, %v277, -inf
    %281 = vmax.xlane.f32.xlu0 %v280
    %v282 = vpop.xlane.xlu0 %281
    %v284 = vlaneseq
    %v285 = vshrl.u32 %v284, 7
    %v286 = vsub.s32 0, %v285
    %v287 = vrot.slane %v282, %v286
    %v288 = vlaneseq
    %v289 = vshrl.u32 %v288, 7
    %v290 = vsub.s32 1, %v289
    %v291 = vrot.slane %v282, %v290
    %v294 = vsub.f32 %v240, %v287
    %v295 = vsub.f32 %v243, %v287
    %v296 = vsub.f32 %v246, %v291
    %v297 = vsub.f32 %v249, %v291
    %v298 = vmul.f32 %v294, 1.442695
    %v299 = vpow.pop %v298
    %v300 = vmul.f32 %v295, 1.442695
    %v301 = vpow.pop %v300
    %v302 = vmul.f32 %v296, 1.442695
    %v303 = vpow.pop %v302
    %v304 = vmul.f32 %v297, 1.442695
    %v305 = vpow.pop %v304
    %310 = vset.pattern.permute.xlu0 0
    %311 = vperm.xlu0 %310, %v299
    %v312 = vpop.permute.xlu0 %311
    %313 = vset.pattern.permute.xlu0 0
    %314 = vperm.xlu0 %313, %v301
    %v315 = vpop.permute.xlu0 %314
    %316 = vset.pattern.permute.xlu0 0
    %317 = vperm.xlu0 %316, %v303
    %v318 = vpop.permute.xlu0 %317
    %319 = vset.pattern.permute.xlu0 0
    %320 = vperm.xlu0 %319, %v305
    %v321 = vpop.permute.xlu0 %320
    %v322 = vlaneseq
    %v323 = vshrl.u32 %v322, 7
    %v324 = vsub.s32 %v255, %v323
    %v325 = vrot.slane %v312, %v324
    %v326 = vlaneseq
    %v327 = vshrl.u32 %v326, 7
    %v328 = vsub.s32 %v260, %v327
    %v329 = vrot.slane %v315, %v328
    %v330 = vsel %vm265, %v329, %v325
    %v331 = vlaneseq
    %v332 = vshrl.u32 %v331, 7
    %v333 = vsub.s32 %v255, %v332
    %v334 = vrot.slane %v318, %v333
    %v335 = vlaneseq
    %v336 = vshrl.u32 %v335, 7
    %v337 = vsub.s32 %v260, %v336
    %v338 = vrot.slane %v321, %v337
    %v339 = vsel %vm265, %v338, %v334
    %v340 = vsel %vm276, %v339, %v330
    %v342 = vsel %vm279, %v340, 0.0
    %343 = vadd.xlane.f32.xlu0 %v342
    %v344 = vpop.xlane.xlu0 %343
    %v345 = vrcp.pop %v344
    %v347 = vlaneseq
    %v348 = vshrl.u32 %v347, 7
    %v349 = vsub.s32 0, %v348
    %v350 = vrot.slane %v345, %v349
    %v351 = vlaneseq
    %v352 = vshrl.u32 %v351, 7
    %v353 = vsub.s32 1, %v352
    %v354 = vrot.slane %v345, %v353
    %v357 = vmul.f32 %v299, %v350
    %v358 = vmul.f32 %v301, %v350
    %v359 = vmul.f32 %v303, %v354
    %v360 = vmul.f32 %v305, %v354
    %363 = vset.pattern.permute.xlu0 0
    %364 = vperm.xlu0 %363, %v357
    %v365 = vpop.permute.xlu0 %364
    %366 = vset.pattern.permute.xlu0 0
    %367 = vperm.xlu0 %366, %v358
    %v368 = vpop.permute.xlu0 %367
    %v369 = vlaneseq
    %v370 = vshrl.u32 %v369, 7
    %v371 = vsub.s32 %v255, %v370
    %v372 = vrot.slane %v365, %v371
    %v373 = vlaneseq
    %v374 = vshrl.u32 %v373, 7
    %v375 = vsub.s32 %v260, %v374
    %v376 = vrot.slane %v368, %v375
    %v377 = vsel %vm265, %v376, %v372
    %vm378 = vcmask 130048
    %v379 = vsel %vm378, %v377, 0
    %381 = vmatprep.subr.mxu0 0.0
    %382 = vmatpush1.msra.mxu0 0.0
    %383 = vmatprep.subr.mxu0 0.0
    %384 = vmatpush1.msra.mxu0 0.0
    %385 = vmatprep.subr.mxu0 0.0
    %386 = vmatpush1.msra.mxu0 0.0
    %387 = vmatprep.subr.mxu0 0.0
    %388 = vmatpush1.msra.mxu0 0.0
    %389 = vmatprep.subr.mxu0 0.0
    %390 = vmatpush1.msra.mxu0 0.0
    %391 = vmatprep.subr.mxu0 0.0
    %392 = vmatpush1.msra.mxu0 0.0
    %393 = vmatprep.subr.mxu0 0.0
    %394 = vmatpush1.msra.mxu0 0.0
    %395 = vmatprep.subr.mxu0 0.0
    %396 = vmatpush1.msra.mxu0 0.0
    %397 = vmatprep.subr.mxu0 0.0
    %398 = vmatpush1.msra.mxu0 0.0
    %399 = vmatprep.subr.mxu0 0.0
    %400 = vmatpush1.msra.mxu0 0.0
    %401 = vmatprep.subr.mxu0 0.0
    %402 = vmatpush1.msra.mxu0 0.0
    %403 = vmatprep.subr.mxu0 0.0
    %404 = vmatpush1.msra.mxu0 0.0
    %405 = vmatprep.subr.mxu0 0.0
    %406 = vmatpush1.msra.mxu0 0.0
    %407 = vmatprep.subr.mxu0 0.0
    %408 = vmatpush1.msra.mxu0 0.0
    %409 = vmatprep.subr.mxu0 0.0
    %410 = vmatpush1.msra.mxu0 %v67
    %411 = vmatprep.subr.mxu0 0.0
    %412 = vmatpush1.msra.mxu0 %v66
    %413 = vmatprep.subr.mxu0 0.0
    %414 = vmatpush2.msra.mxu0 0.0
    %415 = vmatprep.subr.mxu0 0.0
    %416 = vmatpush2.msra.mxu0 0.0
    %417 = vmatprep.subr.mxu0 0.0
    %418 = vmatpush2.msra.mxu0 0.0
    %419 = vmatprep.subr.mxu0 0.0
    %420 = vmatpush2.msra.mxu0 0.0
    %421 = vmatprep.subr.mxu0 0.0
    %422 = vmatpush2.msra.mxu0 0.0
    %423 = vmatprep.subr.mxu0 0.0
    %424 = vmatpush2.msra.mxu0 0.0
    %425 = vmatprep.subr.mxu0 0.0
    %426 = vmatpush2.msra.mxu0 0.0
    %427 = vmatprep.subr.mxu0 0.0
    %428 = vmatpush2.msra.mxu0 0.0
    %429 = vmatprep.subr.mxu0 0.0
    %430 = vmatpush2.msra.mxu0 0.0
    %431 = vmatprep.subr.mxu0 0.0
    %432 = vmatpush2.msra.mxu0 0.0
    %433 = vmatprep.subr.mxu0 0.0
    %434 = vmatpush2.msra.mxu0 0.0
    %435 = vmatprep.subr.mxu0 0.0
    %436 = vmatpush2.msra.mxu0 0.0
    %437 = vmatprep.subr.mxu0 0.0
    %438 = vmatpush2.msra.mxu0 0.0
    %439 = vmatprep.subr.mxu0 0.0
    %440 = vmatpush2.msra.mxu0 0.0
    %441 = vmatprep.subr.mxu0 0.0
    %442 = vmatpush2.msra.mxu0 0.0
    %443 = vmatprep.subr.mxu0 0.0
    %444 = vmatpush2.msra.mxu0 0.0
    %445 = vmatprep.mubr.f32.mxu0 0.0
    %446 = vmatmul.mubr.f32.gmra.mxu0 %v379
    %v447 = vpop.f32.mrf.mxu0
    %v448 = vadd.f32 0.0, %v447
    %v449 = vpop.f32.mrf.mxu0
    %450 = vdwg.mxu0
    %453 = vset.pattern.permute.xlu0 0
    %454 = vperm.xlu0 %453, %v359
    %v455 = vpop.permute.xlu0 %454
    %456 = vset.pattern.permute.xlu0 0
    %457 = vperm.xlu0 %456, %v360
    %v458 = vpop.permute.xlu0 %457
    %v459 = vlaneseq
    %v460 = vshrl.u32 %v459, 7
    %v461 = vsub.s32 %v255, %v460
    %v462 = vrot.slane %v455, %v461
    %v463 = vlaneseq
    %v464 = vshrl.u32 %v463, 7
    %v465 = vsub.s32 %v260, %v464
    %v466 = vrot.slane %v458, %v465
    %v467 = vsel %vm265, %v466, %v462
    %v468 = vsel %vm378, %v467, 0
    %470 = vmatprep.subr.mxu0 0.0
    %471 = vmatpush1.msra.mxu0 0.0
    %472 = vmatprep.subr.mxu0 0.0
    %473 = vmatpush1.msra.mxu0 0.0
    %474 = vmatprep.subr.mxu0 0.0
    %475 = vmatpush1.msra.mxu0 0.0
    %476 = vmatprep.subr.mxu0 0.0
    %477 = vmatpush1.msra.mxu0 0.0
    %478 = vmatprep.subr.mxu0 0.0
    %479 = vmatpush1.msra.mxu0 0.0
    %480 = vmatprep.subr.mxu0 0.0
    %481 = vmatpush1.msra.mxu0 0.0
    %482 = vmatprep.subr.mxu0 0.0
    %483 = vmatpush1.msra.mxu0 0.0
    %484 = vmatprep.subr.mxu0 0.0
    %485 = vmatpush1.msra.mxu0 0.0
    %486 = vmatprep.subr.mxu0 0.0
    %487 = vmatpush1.msra.mxu0 0.0
    %488 = vmatprep.subr.mxu0 0.0
    %489 = vmatpush1.msra.mxu0 0.0
    %490 = vmatprep.subr.mxu0 0.0
    %491 = vmatpush1.msra.mxu0 0.0
    %492 = vmatprep.subr.mxu0 0.0
    %493 = vmatpush1.msra.mxu0 0.0
    %494 = vmatprep.subr.mxu0 0.0
    %495 = vmatpush1.msra.mxu0 0.0
    %496 = vmatprep.subr.mxu0 0.0
    %497 = vmatpush1.msra.mxu0 0.0
    %498 = vmatprep.subr.mxu0 0.0
    %499 = vmatpush1.msra.mxu0 %v69
    %500 = vmatprep.subr.mxu0 0.0
    %501 = vmatpush1.msra.mxu0 %v68
    %502 = vmatprep.subr.mxu0 0.0
    %503 = vmatpush2.msra.mxu0 0.0
    %504 = vmatprep.subr.mxu0 0.0
    %505 = vmatpush2.msra.mxu0 0.0
    %506 = vmatprep.subr.mxu0 0.0
    %507 = vmatpush2.msra.mxu0 0.0
    %508 = vmatprep.subr.mxu0 0.0
    %509 = vmatpush2.msra.mxu0 0.0
    %510 = vmatprep.subr.mxu0 0.0
    %511 = vmatpush2.msra.mxu0 0.0
    %512 = vmatprep.subr.mxu0 0.0
    %513 = vmatpush2.msra.mxu0 0.0
    %514 = vmatprep.subr.mxu0 0.0
    %515 = vmatpush2.msra.mxu0 0.0
    %516 = vmatprep.subr.mxu0 0.0
    %517 = vmatpush2.msra.mxu0 0.0
    %518 = vmatprep.subr.mxu0 0.0
    %519 = vmatpush2.msra.mxu0 0.0
    %520 = vmatprep.subr.mxu0 0.0
    %521 = vmatpush2.msra.mxu0 0.0
    %522 = vmatprep.subr.mxu0 0.0
    %523 = vmatpush2.msra.mxu0 0.0
    %524 = vmatprep.subr.mxu0 0.0
    %525 = vmatpush2.msra.mxu0 0.0
    %526 = vmatprep.subr.mxu0 0.0
    %527 = vmatpush2.msra.mxu0 0.0
    %528 = vmatprep.subr.mxu0 0.0
    %529 = vmatpush2.msra.mxu0 0.0
    %530 = vmatprep.subr.mxu0 0.0
    %531 = vmatpush2.msra.mxu0 0.0
    %532 = vmatprep.subr.mxu0 0.0
    %533 = vmatpush2.msra.mxu0 0.0
    %534 = vmatprep.mubr.f32.mxu0 0.0
    %535 = vmatmul.mubr.f32.gmra.mxu0 %v468
    %v536 = vpop.f32.mrf.mxu0
    %v537 = vadd.f32 0.0, %v536
    %v538 = vpop.f32.mrf.mxu0
    %539 = vdwg.mxu0
    %v542 = vrot.slane %v537, 7
    %v543 = vsel %vm276, %v542, %v448
    %vm545 = vcmask 254976
    %546 = vst.msk [vmem:[#allocation8] sm:$0x3] %vm545, %v543
    %v547 = vsel %vm276, %v467, %v377
    %549 = vst.msk [vmem:[#allocation9] sm:$0x3] %vm279, %v547
    %v550 = vadd.f32 %v70, %v547
    %551 = vst.msk [vmem:[#allocation11] sm:$0x3] %vm279, %v550
    // Predicated region
    $region34: #{tpu_custom_call.1} parent=1 // pred_check
      _
    $region35: #{tpu_custom_call.1} parent=1 // pred_check_branch
      %553 = sbr.rel (0) target = $region37
    $region36: #{tpu_custom_call.1} parent=1 // pred_region
      %s555 = ssub.s32 32, 32
      %556 = vsyncadd [#allocation4], %s555
      %s558 = sshll.u32 [#allocation8], 4
      %s559 = int_to_ptr.vmem [resolvable:$true] %s558
      %561 = dma.vmem_to_hbm [thread:$0]  %s559, 32, %s5, [#allocation4]
    $region37: #{tpu_custom_call.1} parent=1 // pred_fallthru
      _
    // Predicated region
    $region38: #{tpu_custom_call.1} parent=1 // pred_check
      _
    $region39: #{tpu_custom_call.1} parent=1 // pred_check_branch
      %563 = sbr.rel (0) target = $region41
    $region40: #{tpu_custom_call.1} parent=1 // pred_region
      %s565 = ssub.s32 32, 32
      %566 = vsyncadd [#allocation10], %s565
      %s568 = sshll.u32 [#allocation9], 4
      %s569 = int_to_ptr.vmem [resolvable:$true] %s568
      %571 = dma.vmem_to_hbm [thread:$0]  %s569, 32, %s6, [#allocation10]
    $region41: #{tpu_custom_call.1} parent=1 // pred_fallthru
      _
    // Predicated region
    $region42: #{tpu_custom_call.1} parent=1 // pred_check
      _
    $region43: #{tpu_custom_call.1} parent=1 // pred_check_branch
      %573 = sbr.rel (0) target = $region45
    $region44: #{tpu_custom_call.1} parent=1 // pred_region
      %s575 = ssub.s32 32, 32
      %576 = vsyncadd [#allocation10], %s575
      %s578 = sshll.u32 [#allocation11], 4
      %s579 = int_to_ptr.vmem [resolvable:$true] %s578
      %581 = dma.vmem_to_hbm [thread:$0]  %s579, 32, %s7, [#allocation10]
    $region45: #{tpu_custom_call.1} parent=1 // pred_fallthru
      _
    // Predicated region
    $region46: #{tpu_custom_call.1} parent=1 // pred_check
      _
    $region47: #{tpu_custom_call.1} parent=1 // pred_check_branch
      %583 = sbr.rel (0) target = $region49
    $region48: #{tpu_custom_call.1} parent=1 // pred_region
      %584 = dma.done [#allocation4], 32
    $region49: #{tpu_custom_call.1} parent=1 // pred_fallthru
      _
    // Predicated region
    $region50: #{tpu_custom_call.1} parent=1 // pred_check
      _
    $region51: #{tpu_custom_call.1} parent=1 // pred_check_branch
      %586 = sbr.rel (0) target = $region53
    $region52: #{tpu_custom_call.1} parent=1 // pred_region
      %587 = dma.done [#allocation10], 32
    $region53: #{tpu_custom_call.1} parent=1 // pred_fallthru
      _
    // Predicated region
    $region54: #{tpu_custom_call.1} parent=1 // pred_check
      _
    $region55: #{tpu_custom_call.1} parent=1 // pred_check_branch
      %589 = sbr.rel (0) target = $region57
    $region56: #{tpu_custom_call.1} parent=1 // pred_region
      %590 = dma.done [#allocation10], 32
    $region57: #{tpu_custom_call.1} parent=1 // pred_fallthru
      _
    %591 = vsyncpa [#allocation3], 1
    %592 = vsyncpa [#allocation6], 1
    %593 = vsyncpa [#allocation4], 1
    %594 = vsyncpa [#allocation10], 1

</llo_original>
